<compile_context>
chip_gen: v7x
topology: tpu7x:2x2x1
jax: 0.10.0
libtpu: 0.0.40
codegen_flags: <defaults>
</compile_context>

<pallas_src>
import math

import jax
import jax.numpy as jnp
import numpy as np
from jax.experimental import pallas as pl
from jax.experimental.pallas import tpu as pltpu

# ------------------------- problem sizes (small, synthetic) -------------------------
N, C, L = 2, 4, 64          # batch, channels, sequence length  (N*L = 128 -> lane dense)
NL = N * L                  # folded batch*length lane axis
K = 3                       # conv kernel size (padding=1 keeps length)
NLAYERS = 2                 # "nlayers" argument of ResNetBlock
NCONV = NLAYERS + 1         # number of Conv1d/BatchNorm1d pairs in the block
BN_EPS = 1e-5

# Matmul operand dtype.  Flip to jnp.bfloat16 at production channel counts: CP below rounds
# to the 16-row bf16 sublane tile automatically, accumulation stays f32, BN statistics and
# the residual stay f32, and the correctness tolerance must be relaxed (see review note).
MATMUL_DTYPE = jnp.float32

SUBLANE = 16 if jnp.dtype(MATMUL_DTYPE).itemsize == 2 else 8   # dtype-aware sublane tile
CP = ((C + SUBLANE - 1) // SUBLANE) * SUBLANE                  # padded channel rows
CK = K * CP                                                    # fused contraction dim

# Fused-tap slab (one MXU push per conv layer) for tiny C; at CP >= 128 use three
# accumulating per-tap dots instead and drop the VMEM slab entirely (v7x / v5e preference).
USE_FUSED_SLAB = CP < 128


# ------------------------------- Pallas kernel --------------------------------------
def resnet_block_kernel(x_ref, w_ref, g_ref, beta_ref, out_ref, *scratch):
    """Whole ResNet block in one kernel invocation.

    x_ref:    (CP, NL)           input activations, batch folded into lanes, pad rows zero
    w_ref:    fused:   (NCONV, CP, CK)    packed conv weights, tap t in cols [t*CP, t*CP+C)
              per-tap: (NCONV, K, CP, CP)
    g_ref:    (NCONV, CP, 1)     batchnorm gamma (zero in pad rows)
    beta_ref: (NCONV, CP, 1)     batchnorm beta  (zero in pad rows)
    out_ref:  (CP, NL)           output (pad rows stay zero)
    scratch:  [(CK, NL) VMEM slab] when USE_FUSED_SLAB, otherwise empty
    """
    slab_ref = scratch[0] if USE_FUSED_SLAB else None
    x = x_ref[...]                                   # (CP, NL) f32, pad rows zero

    # Edge masks for the k=3 / pad=1 conv, hoisted out of the layer loop.  After folding the
    # batch into the lane axis, lane j belongs to sample j // L; rolled values that wrap
    # across a sample boundary land exactly where the zero padding belongs.
    pos = jax.lax.broadcasted_iota(jnp.int32, (1, NL), 1)
    at_left = (pos % L) == 0                         # h[l-1] does not exist here
    at_right = (pos % L) == (L - 1)                  # h[l+1] does not exist here
    inv_nl = 1.0 / NL

    h = x
    for li in range(NCONV):
        if li > 0:
            h = jnp.maximum(h, 0.0)                  # ReLU between conv layers (f32, VPU)

        # --- Conv1d(k=3, pad=1, stride=1) ---------------------------------------------
        h_prev = jnp.where(at_left, 0.0, pltpu.roll(h, shift=1, axis=1))       # h[l-1]
        h_next = jnp.where(at_right, 0.0, pltpu.roll(h, shift=NL - 1, axis=1)) # h[l+1]

        if USE_FUSED_SLAB:
            # Fused-tap contraction: slab rows [t*CP, (t+1)*CP) hold tap t's shifted input.
            # Every store is a full CP-row tile (unmasked vst); the slab is fully
            # overwritten each layer, so no zero fill is needed (pad rows of h are zero).
            slab_ref[0 * CP:1 * CP, :] = h_prev.astype(slab_ref.dtype)
            slab_ref[1 * CP:2 * CP, :] = h.astype(slab_ref.dtype)
            slab_ref[2 * CP:3 * CP, :] = h_next.astype(slab_ref.dtype)
            y = jnp.dot(w_ref[li], slab_ref[...],
                        preferred_element_type=jnp.float32)        # (CP, NL) f32 accumulate
        else:
            # No-slab variant: three accumulating per-tap dots (preferred at CP >= 128:
            # v7x's MRB accumulates in place, and it removes the 3x-activation VMEM slab
            # plus its store/load round trip).
            y = jnp.dot(w_ref[li, 0], h_prev.astype(MATMUL_DTYPE),
                        preferred_element_type=jnp.float32)
            y = y + jnp.dot(w_ref[li, 1], h.astype(MATMUL_DTYPE),
                            preferred_element_type=jnp.float32)
            y = y + jnp.dot(w_ref[li, 2], h_next.astype(MATMUL_DTYPE),
                            preferred_element_type=jnp.float32)
        # NOTE: the conv bias is intentionally omitted -- the BatchNorm mean subtraction
        # that follows cancels any per-channel constant exactly.

        # --- BatchNorm1d (training-mode batch stats), single reduction pass ------------
        s1 = jnp.sum(y, axis=1, keepdims=True)                   # (CP,1)
        s2 = jnp.sum(y * y, axis=1, keepdims=True)               # (CP,1)
        mean = s1 * inv_nl
        var = jnp.maximum(s2 * inv_nl - mean * mean, 0.0)        # biased variance
        scale = g_ref[li] * jax.lax.rsqrt(var + BN_EPS)          # (CP,1); pad rows: gamma=0
        shift = beta_ref[li] - mean * scale
        h = y * scale + shift                                    # pad rows stay exactly 0

    # residual add + final ReLU, one unmasked full-tile store
    out_ref[...] = jnp.maximum(h + x, 0.0)


# ---------------------------------- wrapper ------------------------------------------
def resnet_block(x, w, b, gamma, beta):
    """x: (N,C,L); w: (NCONV,Cout,Cin,K); b/gamma/beta: (NCONV,C). Returns (N,C,L)."""
    del b  # conv bias cancels exactly under the following BatchNorm (see kernel comment)

    w_taps = jnp.transpose(w, (0, 3, 1, 2)).astype(jnp.float32)   # (NCONV, K, Cout, Cin)
    if USE_FUSED_SLAB:
        # Fused packing: (NCONV, CP, CK), tap t in columns [t*CP, t*CP + C); pad rows/cols 0.
        w_packed = jnp.zeros((NCONV, CP, CK), jnp.float32)
        for t in range(K):
            w_packed = w_packed.at[:, :C, t * CP:t * CP + C].set(w_taps[:, t])
        w_spec = pl.BlockSpec((NCONV, CP, CK), lambda i: (0, 0, 0))
        scratch_shapes = [pltpu.VMEM((CK, NL), MATMUL_DTYPE)]
    else:
        # Per-tap packing: (NCONV, K, CP, CP); pad rows/cols zero.
        w_packed = jnp.zeros((NCONV, K, CP, CP), jnp.float32)
        w_packed = w_packed.at[:, :, :C, :C].set(w_taps)
        w_spec = pl.BlockSpec((NCONV, K, CP, CP), lambda i: (0, 0, 0, 0))
        scratch_shapes = []
    w_packed = w_packed.astype(MATMUL_DTYPE)

    # BN params padded to CP rows with zeros so pad channels stay exactly zero in-kernel.
    g2 = jnp.zeros((NCONV, CP, 1), jnp.float32).at[:, :C, 0].set(gamma.astype(jnp.float32))
    be2 = jnp.zeros((NCONV, CP, 1), jnp.float32).at[:, :C, 0].set(beta.astype(jnp.float32))

    # Lane-dense, sublane-padded layout: (C, N*L) -> pad channel rows to CP.
    x2d = jnp.zeros((CP, NL), jnp.float32).at[:C].set(
        jnp.transpose(x, (1, 0, 2)).reshape(C, NL).astype(jnp.float32))

    itemsize = jnp.dtype(MATMUL_DTYPE).itemsize
    cost = pl.CostEstimate(
        flops=int(2 * NCONV * CP * CK * NL + 10 * NCONV * CP * NL),
        transcendentals=int(NCONV * CP),
        bytes_accessed=int(4 * 2 * CP * NL + itemsize * NCONV * CP * CK
                           + 4 * 2 * NCONV * CP),
    )

    out2d = pl.pallas_call(
        resnet_block_kernel,
        out_shape=jax.ShapeDtypeStruct((CP, NL), jnp.float32),
        # Single grid step: batch-stat BatchNorm needs a global (N*L) reduction and the whole
        # problem fits one tile at these sizes.  The leading (future L-tile) axis is already
        # marked "parallel" so scaling up shards it across v7x's two TensorCores.
        grid=(1,),
        in_specs=[
            pl.BlockSpec((CP, NL), lambda i: (0, 0)),
            w_spec,
            pl.BlockSpec((NCONV, CP, 1), lambda i: (0, 0, 0)),
            pl.BlockSpec((NCONV, CP, 1), lambda i: (0, 0, 0)),
        ],
        out_specs=pl.BlockSpec((CP, NL), lambda i: (0, 0)),
        scratch_shapes=scratch_shapes,
        compiler_params=pltpu.CompilerParams(dimension_semantics=("parallel",)),
        cost_estimate=cost,
    )(x2d, w_packed, g2, be2)

    return jnp.transpose(out2d[:C].reshape(C, N, L), (1, 0, 2))


# ------------------------------ pure-JAX reference ------------------------------------
def resnet_block_ref(x, w, b, gamma, beta):
    h = x
    for li in range(NCONV):
        if li > 0:
            h = jnp.maximum(h, 0.0)
        y = jax.lax.conv_general_dilated(
            h, w[li], window_strides=(1,), padding=((1, 1),),
            dimension_numbers=("NCH", "OIH", "NCH"),
            precision=jax.lax.Precision.HIGHEST,
        ) + b[li][None, :, None]
        mean = jnp.mean(y, axis=(0, 2), keepdims=True)
        var = jnp.mean((y - mean) ** 2, axis=(0, 2), keepdims=True)
        y = (y - mean) * jax.lax.rsqrt(var + BN_EPS)
        y = y * gamma[li][None, :, None] + beta[li][None, :, None]
        h = y
    return jnp.maximum(h + x, 0.0)


# ------------------------------------ main --------------------------------------------
if __name__ == "__main__":
    key = jax.random.PRNGKey(0)
    k1, k2, k3, k4, k5 = jax.random.split(key, 5)

    # deterministic synthetic parameters (kaiming-uniform-like scaling for the convs)
    bound = 1.0 / math.sqrt(C * K)
    w = jax.random.uniform(k1, (NCONV, C, C, K), jnp.float32, -bound, bound)
    b = jax.random.uniform(k2, (NCONV, C), jnp.float32, -bound, bound)
    gamma = jax.random.uniform(k3, (NCONV, C), jnp.float32, 0.5, 1.5)
    beta = jax.random.uniform(k4, (NCONV, C), jnp.float32, -0.5, 0.5)

    x = jax.random.normal(k5, (N, C, L), jnp.float32)

    out = jax.block_until_ready(resnet_block(x, w, b, gamma, beta))
    ref = jax.block_until_ready(resnet_block_ref(x, w, b, gamma, beta))

    assert out.shape == (N, C, L) and out.dtype == jnp.float32
    # f32 matmul path -> tight tolerance; with MATMUL_DTYPE=bfloat16 relax to ~2e-2.
    np.testing.assert_allclose(np.asarray(out), np.asarray(ref), rtol=5e-3, atol=5e-3)
    print("KERNEL_OK")
</pallas_src>

<mosaic_0001>
module attributes {stable_mosaic.version = 11 : i64} {
  func.func @resnet_block_kernel(%arg0: i32, %arg1: memref<8x128xf32, #tpu.memory_space<vmem>>, %arg2: memref<3x8x24xf32, #tpu.memory_space<vmem>>, %arg3: memref<3x8x1xf32, #tpu.memory_space<vmem>>, %arg4: memref<3x8x1xf32, #tpu.memory_space<vmem>>, %arg5: memref<8x128xf32, #tpu.memory_space<vmem>>, %arg6: memref<24x128xf32, #tpu.memory_space<vmem>>) attributes {dimension_semantics = [#tpu.dimension_semantics<parallel>], iteration_bounds = array<i64: 1>, scalar_prefetch = 0 : i64, scratch_operands = 1 : i64, tpu.core_type = #tpu.core_type<tc>, window_params = [{pipeline_mode = #tpu.pipeline_mode<synchronous>, transform_indices = @transform_0, window_bounds = array<i64: 8, 128>}, {pipeline_mode = #tpu.pipeline_mode<synchronous>, transform_indices = @transform_1, window_bounds = array<i64: 3, 8, 24>}, {pipeline_mode = #tpu.pipeline_mode<synchronous>, transform_indices = @transform_2, window_bounds = array<i64: 3, 8, 1>}, {pipeline_mode = #tpu.pipeline_mode<synchronous>, transform_indices = @transform_3, window_bounds = array<i64: 3, 8, 1>}, {pipeline_mode = #tpu.pipeline_mode<synchronous>, transform_indices = @transform_4, window_bounds = array<i64: 8, 128>}]} {
    %c0 = arith.constant 0 : index
    %c0_0 = arith.constant 0 : index
    %0 = vector.load %arg1[%c0, %c0_0] : memref<8x128xf32, #tpu.memory_space<vmem>>, vector<8x128xf32>
    %1 = tpu.iota {dimensions = array<i32: 1>} : vector<1x128xi32>
    %c64_i32 = arith.constant 64 : i32
    %c0_i32 = arith.constant 0 : i32
    %2 = arith.cmpi eq, %c64_i32, %c0_i32 : i32
    %c1_i32 = arith.constant 1 : i32
    %3 = arith.select %2, %c1_i32, %c64_i32 : i32
    %4 = vector.broadcast %3 : i32 to vector<1x128xi32>
    %5 = arith.remsi %1, %4 : vector<1x128xi32>
    %c0_i32_1 = arith.constant 0 : i32
    %6 = vector.broadcast %c0_i32_1 : i32 to vector<1x128xi32>
    %7 = arith.cmpi ne, %5, %6 : vector<1x128xi32>
    %c0_i32_2 = arith.constant 0 : i32
    %8 = vector.broadcast %c0_i32_2 : i32 to vector<1x128xi32>
    %9 = arith.cmpi slt, %5, %8 : vector<1x128xi32>
    %c0_i32_3 = arith.constant 0 : i32
    %10 = arith.cmpi slt, %3, %c0_i32_3 : i32
    %11 = vector.broadcast %10 : i1 to vector<1x128xi1>
    %12 = vector.broadcast %11 : vector<1x128xi1> to vector<1x128xi1>
    %13 = arith.xori %9, %12 : vector<1x128xi1>
    %14 = arith.andi %13, %7 : vector<1x128xi1>
    %15 = vector.broadcast %3 : i32 to vector<1x128xi32>
    %16 = arith.addi %5, %15 : vector<1x128xi32>
    %17 = arith.select %14, %16, %5 : vector<1x128xi1>, vector<1x128xi32>
    %c0_i32_4 = arith.constant 0 : i32
    %18 = vector.broadcast %c0_i32_4 : i32 to vector<1x128xi32>
    %19 = arith.cmpi eq, %17, %18 : vector<1x128xi32>
    %c64_i32_5 = arith.constant 64 : i32
    %c0_i32_6 = arith.constant 0 : i32
    %20 = arith.cmpi eq, %c64_i32_5, %c0_i32_6 : i32
    %c1_i32_7 = arith.constant 1 : i32
    %21 = arith.select %20, %c1_i32_7, %c64_i32_5 : i32
    %22 = vector.broadcast %21 : i32 to vector<1x128xi32>
    %23 = arith.remsi %1, %22 : vector<1x128xi32>
    %c0_i32_8 = arith.constant 0 : i32
    %24 = vector.broadcast %c0_i32_8 : i32 to vector<1x128xi32>
    %25 = arith.cmpi ne, %23, %24 : vector<1x128xi32>
    %c0_i32_9 = arith.constant 0 : i32
    %26 = vector.broadcast %c0_i32_9 : i32 to vector<1x128xi32>
    %27 = arith.cmpi slt, %23, %26 : vector<1x128xi32>
    %c0_i32_10 = arith.constant 0 : i32
    %28 = arith.cmpi slt, %21, %c0_i32_10 : i32
    %29 = vector.broadcast %28 : i1 to vector<1x128xi1>
    %30 = vector.broadcast %29 : vector<1x128xi1> to vector<1x128xi1>
    %31 = arith.xori %27, %30 : vector<1x128xi1>
    %32 = arith.andi %31, %25 : vector<1x128xi1>
    %33 = vector.broadcast %21 : i32 to vector<1x128xi32>
    %34 = arith.addi %23, %33 : vector<1x128xi32>
    %35 = arith.select %32, %34, %23 : vector<1x128xi1>, vector<1x128xi32>
    %c63_i32 = arith.constant 63 : i32
    %36 = vector.broadcast %c63_i32 : i32 to vector<1x128xi32>
    %37 = arith.cmpi eq, %35, %36 : vector<1x128xi32>
    %c1_i32_11 = arith.constant 1 : i32
    %38 = tpu.dynamic_rotate %0 by %c1_i32_11 dim 1 : vector<8x128xf32>, i32 -> vector<8x128xf32>
    %cst = arith.constant 0.000000e+00 : f32
    %39 = vector.shape_cast %19 : vector<1x128xi1> to vector<1x128xi1>
    %40 = vector.broadcast %39 : vector<1x128xi1> to vector<8x128xi1>
    %41 = vector.broadcast %cst : f32 to vector<8x128xf32>
    %42 = arith.select %40, %41, %38 : vector<8x128xi1>, vector<8x128xf32>
    %c127_i32 = arith.constant 127 : i32
    %43 = tpu.dynamic_rotate %0 by %c127_i32 dim 1 : vector<8x128xf32>, i32 -> vector<8x128xf32>
    %cst_12 = arith.constant 0.000000e+00 : f32
    %44 = vector.shape_cast %37 : vector<1x128xi1> to vector<1x128xi1>
    %45 = vector.broadcast %44 : vector<1x128xi1> to vector<8x128xi1>
    %46 = vector.broadcast %cst_12 : f32 to vector<8x128xf32>
    %47 = arith.select %45, %46, %43 : vector<8x128xi1>, vector<8x128xf32>
    %c0_13 = arith.constant 0 : index
    %c0_14 = arith.constant 0 : index
    %48 = vector.load %arg6[%c0_13, %c0_14] : memref<24x128xf32, #tpu.memory_space<vmem>>, vector<8x128xf32>
    tpu.vector_store %arg6[%c0_13, %c0_14], %42 {strides = array<i32>} : memref<24x128xf32, #tpu.memory_space<vmem>>, vector<8x128xf32>,
    %c8 = arith.constant 8 : index
    %c0_15 = arith.constant 0 : index
    %49 = vector.load %arg6[%c8, %c0_15] : memref<24x128xf32, #tpu.memory_space<vmem>>, vector<8x128xf32>
    tpu.vector_store %arg6[%c8, %c0_15], %0 {strides = array<i32>} : memref<24x128xf32, #tpu.memory_space<vmem>>, vector<8x128xf32>,
    %c16 = arith.constant 16 : index
    %c0_16 = arith.constant 0 : index
    %50 = vector.load %arg6[%c16, %c0_16] : memref<24x128xf32, #tpu.memory_space<vmem>>, vector<8x128xf32>
    tpu.vector_store %arg6[%c16, %c0_16], %47 {strides = array<i32>} : memref<24x128xf32, #tpu.memory_space<vmem>>, vector<8x128xf32>,
    %c0_17 = arith.constant 0 : index
    %c0_18 = arith.constant 0 : index
    %c0_19 = arith.constant 0 : index
    %51 = vector.load %arg2[%c0_17, %c0_18, %c0_19] : memref<3x8x24xf32, #tpu.memory_space<vmem>>, vector<1x8x24xf32>
    %52 = vector.shape_cast %51 : vector<1x8x24xf32> to vector<8x24xf32>
    %c0_20 = arith.constant 0 : index
    %c0_21 = arith.constant 0 : index
    %53 = vector.load %arg6[%c0_20, %c0_21] : memref<24x128xf32, #tpu.memory_space<vmem>>, vector<24x128xf32>
    %cst_22 = arith.constant dense<0.000000e+00> : vector<8x128xf32>
    %54 = tpu.matmul %52, %53, %cst_22 {dimension_numbers = #tpu.dot_dimension_numbers<[1], [0], [0], [1], [0, 0, 1, 1], [], []>} : vector<8x24xf32>, vector<24x128xf32>, vector<8x128xf32> -> vector<8x128xf32>
    %cst_23 = arith.constant dense<0.000000e+00> : vector<8xf32>
    %55 = vector.multi_reduction <add>, %54, %cst_23 [1] : vector<8x128xf32> to vector<8xf32>
    %56 = vector.shape_cast %55 : vector<8xf32> to vector<8x1xf32>
    %57 = arith.mulf %54, %54 : vector<8x128xf32>
    %cst_24 = arith.constant dense<0.000000e+00> : vector<8xf32>
    %58 = vector.multi_reduction <add>, %57, %cst_24 [1] : vector<8x128xf32> to vector<8xf32>
    %59 = vector.shape_cast %58 : vector<8xf32> to vector<8x1xf32>
    %cst_25 = arith.constant 7.812500e-03 : f32
    %60 = vector.broadcast %cst_25 : f32 to vector<8x1xf32>
    %61 = arith.mulf %56, %60 : vector<8x1xf32>
    %cst_26 = arith.constant 7.812500e-03 : f32
    %62 = vector.broadcast %cst_26 : f32 to vector<8x1xf32>
    %63 = arith.mulf %59, %62 : vector<8x1xf32>
    %64 = arith.mulf %61, %61 : vector<8x1xf32>
    %65 = arith.subf %63, %64 : vector<8x1xf32>
    %cst_27 = arith.constant 0.000000e+00 : f32
    %66 = vector.broadcast %cst_27 : f32 to vector<8x1xf32>
    %67 = arith.maximumf %65, %66 : vector<8x1xf32>
    %c0_28 = arith.constant 0 : index
    %c0_29 = arith.constant 0 : index
    %c0_30 = arith.constant 0 : index
    %68 = vector.load %arg3[%c0_28, %c0_29, %c0_30] : memref<3x8x1xf32, #tpu.memory_space<vmem>>, vector<1x8x1xf32>
    %69 = vector.shape_cast %68 : vector<1x8x1xf32> to vector<8x1xf32>
    %cst_31 = arith.constant 9.99999974E-6 : f32
    %70 = vector.broadcast %cst_31 : f32 to vector<8x1xf32>
    %71 = arith.addf %67, %70 : vector<8x1xf32>
    %72 = math.rsqrt %71 : vector<8x1xf32>
    %73 = arith.mulf %69, %72 : vector<8x1xf32>
    %c0_32 = arith.constant 0 : index
    %c0_33 = arith.constant 0 : index
    %c0_34 = arith.constant 0 : index
    %74 = vector.load %arg4[%c0_32, %c0_33, %c0_34] : memref<3x8x1xf32, #tpu.memory_space<vmem>>, vector<1x8x1xf32>
    %75 = vector.shape_cast %74 : vector<1x8x1xf32> to vector<8x1xf32>
    %76 = arith.mulf %61, %73 : vector<8x1xf32>
    %77 = arith.subf %75, %76 : vector<8x1xf32>
    %78 = vector.broadcast %73 : vector<8x1xf32> to vector<8x128xf32>
    %79 = arith.mulf %54, %78 : vector<8x128xf32>
    %80 = vector.broadcast %77 : vector<8x1xf32> to vector<8x128xf32>
    %81 = arith.addf %79, %80 : vector<8x128xf32>
    %cst_35 = arith.constant 0.000000e+00 : f32
    %82 = vector.broadcast %cst_35 : f32 to vector<8x128xf32>
    %83 = arith.maximumf %81, %82 : vector<8x128xf32>
    %c1_i32_36 = arith.constant 1 : i32
    %84 = tpu.dynamic_rotate %83 by %c1_i32_36 dim 1 : vector<8x128xf32>, i32 -> vector<8x128xf32>
    %cst_37 = arith.constant 0.000000e+00 : f32
    %85 = vector.shape_cast %19 : vector<1x128xi1> to vector<1x128xi1>
    %86 = vector.broadcast %85 : vector<1x128xi1> to vector<8x128xi1>
    %87 = vector.broadcast %cst_37 : f32 to vector<8x128xf32>
    %88 = arith.select %86, %87, %84 : vector<8x128xi1>, vector<8x128xf32>
    %c127_i32_38 = arith.constant 127 : i32
    %89 = tpu.dynamic_rotate %83 by %c127_i32_38 dim 1 : vector<8x128xf32>, i32 -> vector<8x128xf32>
    %cst_39 = arith.constant 0.000000e+00 : f32
    %90 = vector.shape_cast %37 : vector<1x128xi1> to vector<1x128xi1>
    %91 = vector.broadcast %90 : vector<1x128xi1> to vector<8x128xi1>
    %92 = vector.broadcast %cst_39 : f32 to vector<8x128xf32>
    %93 = arith.select %91, %92, %89 : vector<8x128xi1>, vector<8x128xf32>
    %c0_40 = arith.constant 0 : index
    %c0_41 = arith.constant 0 : index
    %94 = vector.load %arg6[%c0_40, %c0_41] : memref<24x128xf32, #tpu.memory_space<vmem>>, vector<8x128xf32>
    tpu.vector_store %arg6[%c0_40, %c0_41], %88 {strides = array<i32>} : memref<24x128xf32, #tpu.memory_space<vmem>>, vector<8x128xf32>,
    %c8_42 = arith.constant 8 : index
    %c0_43 = arith.constant 0 : index
    %95 = vector.load %arg6[%c8_42, %c0_43] : memref<24x128xf32, #tpu.memory_space<vmem>>, vector<8x128xf32>
    tpu.vector_store %arg6[%c8_42, %c0_43], %83 {strides = array<i32>} : memref<24x128xf32, #tpu.memory_space<vmem>>, vector<8x128xf32>,
    %c16_44 = arith.constant 16 : index
    %c0_45 = arith.constant 0 : index
    %96 = vector.load %arg6[%c16_44, %c0_45] : memref<24x128xf32, #tpu.memory_space<vmem>>, vector<8x128xf32>
    tpu.vector_store %arg6[%c16_44, %c0_45], %93 {strides = array<i32>} : memref<24x128xf32, #tpu.memory_space<vmem>>, vector<8x128xf32>,
    %c1 = arith.constant 1 : index
    %c0_46 = arith.constant 0 : index
    %c0_47 = arith.constant 0 : index
    %97 = vector.load %arg2[%c1, %c0_46, %c0_47] : memref<3x8x24xf32, #tpu.memory_space<vmem>>, vector<1x8x24xf32>
    %98 = vector.shape_cast %97 : vector<1x8x24xf32> to vector<8x24xf32>
    %c0_48 = arith.constant 0 : index
    %c0_49 = arith.constant 0 : index
    %99 = vector.load %arg6[%c0_48, %c0_49] : memref<24x128xf32, #tpu.memory_space<vmem>>, vector<24x128xf32>
    %cst_50 = arith.constant dense<0.000000e+00> : vector<8x128xf32>
    %100 = tpu.matmul %98, %99, %cst_50 {dimension_numbers = #tpu.dot_dimension_numbers<[1], [0], [0], [1], [0, 0, 1, 1], [], []>} : vector<8x24xf32>, vector<24x128xf32>, vector<8x128xf32> -> vector<8x128xf32>
    %cst_51 = arith.constant dense<0.000000e+00> : vector<8xf32>
    %101 = vector.multi_reduction <add>, %100, %cst_51 [1] : vector<8x128xf32> to vector<8xf32>
    %102 = vector.shape_cast %101 : vector<8xf32> to vector<8x1xf32>
    %103 = arith.mulf %100, %100 : vector<8x128xf32>
    %cst_52 = arith.constant dense<0.000000e+00> : vector<8xf32>
    %104 = vector.multi_reduction <add>, %103, %cst_52 [1] : vector<8x128xf32> to vector<8xf32>
    %105 = vector.shape_cast %104 : vector<8xf32> to vector<8x1xf32>
    %cst_53 = arith.constant 7.812500e-03 : f32
    %106 = vector.broadcast %cst_53 : f32 to vector<8x1xf32>
    %107 = arith.mulf %102, %106 : vector<8x1xf32>
    %cst_54 = arith.constant 7.812500e-03 : f32
    %108 = vector.broadcast %cst_54 : f32 to vector<8x1xf32>
    %109 = arith.mulf %105, %108 : vector<8x1xf32>
    %110 = arith.mulf %107, %107 : vector<8x1xf32>
    %111 = arith.subf %109, %110 : vector<8x1xf32>
    %cst_55 = arith.constant 0.000000e+00 : f32
    %112 = vector.broadcast %cst_55 : f32 to vector<8x1xf32>
    %113 = arith.maximumf %111, %112 : vector<8x1xf32>
    %c1_56 = arith.constant 1 : index
    %c0_57 = arith.constant 0 : index
    %c0_58 = arith.constant 0 : index
    %114 = vector.load %arg3[%c1_56, %c0_57, %c0_58] : memref<3x8x1xf32, #tpu.memory_space<vmem>>, vector<1x8x1xf32>
    %115 = vector.shape_cast %114 : vector<1x8x1xf32> to vector<8x1xf32>
    %cst_59 = arith.constant 9.99999974E-6 : f32
    %116 = vector.broadcast %cst_59 : f32 to vector<8x1xf32>
    %117 = arith.addf %113, %116 : vector<8x1xf32>
    %118 = math.rsqrt %117 : vector<8x1xf32>
    %119 = arith.mulf %115, %118 : vector<8x1xf32>
    %c1_60 = arith.constant 1 : index
    %c0_61 = arith.constant 0 : index
    %c0_62 = arith.constant 0 : index
    %120 = vector.load %arg4[%c1_60, %c0_61, %c0_62] : memref<3x8x1xf32, #tpu.memory_space<vmem>>, vector<1x8x1xf32>
    %121 = vector.shape_cast %120 : vector<1x8x1xf32> to vector<8x1xf32>
    %122 = arith.mulf %107, %119 : vector<8x1xf32>
    %123 = arith.subf %121, %122 : vector<8x1xf32>
    %124 = vector.broadcast %119 : vector<8x1xf32> to vector<8x128xf32>
    %125 = arith.mulf %100, %124 : vector<8x128xf32>
    %126 = vector.broadcast %123 : vector<8x1xf32> to vector<8x128xf32>
    %127 = arith.addf %125, %126 : vector<8x128xf32>
    %cst_63 = arith.constant 0.000000e+00 : f32
    %128 = vector.broadcast %cst_63 : f32 to vector<8x128xf32>
    %129 = arith.maximumf %127, %128 : vector<8x128xf32>
    %c1_i32_64 = arith.constant 1 : i32
    %130 = tpu.dynamic_rotate %129 by %c1_i32_64 dim 1 : vector<8x128xf32>, i32 -> vector<8x128xf32>
    %cst_65 = arith.constant 0.000000e+00 : f32
    %131 = vector.shape_cast %19 : vector<1x128xi1> to vector<1x128xi1>
    %132 = vector.broadcast %131 : vector<1x128xi1> to vector<8x128xi1>
    %133 = vector.broadcast %cst_65 : f32 to vector<8x128xf32>
    %134 = arith.select %132, %133, %130 : vector<8x128xi1>, vector<8x128xf32>
    %c127_i32_66 = arith.constant 127 : i32
    %135 = tpu.dynamic_rotate %129 by %c127_i32_66 dim 1 : vector<8x128xf32>, i32 -> vector<8x128xf32>
    %cst_67 = arith.constant 0.000000e+00 : f32
    %136 = vector.shape_cast %37 : vector<1x128xi1> to vector<1x128xi1>
    %137 = vector.broadcast %136 : vector<1x128xi1> to vector<8x128xi1>
    %138 = vector.broadcast %cst_67 : f32 to vector<8x128xf32>
    %139 = arith.select %137, %138, %135 : vector<8x128xi1>, vector<8x128xf32>
    %c0_68 = arith.constant 0 : index
    %c0_69 = arith.constant 0 : index
    %140 = vector.load %arg6[%c0_68, %c0_69] : memref<24x128xf32, #tpu.memory_space<vmem>>, vector<8x128xf32>
    tpu.vector_store %arg6[%c0_68, %c0_69], %134 {strides = array<i32>} : memref<24x128xf32, #tpu.memory_space<vmem>>, vector<8x128xf32>,
    %c8_70 = arith.constant 8 : index
    %c0_71 = arith.constant 0 : index
    %141 = vector.load %arg6[%c8_70, %c0_71] : memref<24x128xf32, #tpu.memory_space<vmem>>, vector<8x128xf32>
    tpu.vector_store %arg6[%c8_70, %c0_71], %129 {strides = array<i32>} : memref<24x128xf32, #tpu.memory_space<vmem>>, vector<8x128xf32>,
    %c16_72 = arith.constant 16 : index
    %c0_73 = arith.constant 0 : index
    %142 = vector.load %arg6[%c16_72, %c0_73] : memref<24x128xf32, #tpu.memory_space<vmem>>, vector<8x128xf32>
    tpu.vector_store %arg6[%c16_72, %c0_73], %139 {strides = array<i32>} : memref<24x128xf32, #tpu.memory_space<vmem>>, vector<8x128xf32>,
    %c2 = arith.constant 2 : index
    %c0_74 = arith.constant 0 : index
    %c0_75 = arith.constant 0 : index
    %143 = vector.load %arg2[%c2, %c0_74, %c0_75] : memref<3x8x24xf32, #tpu.memory_space<vmem>>, vector<1x8x24xf32>
    %144 = vector.shape_cast %143 : vector<1x8x24xf32> to vector<8x24xf32>
    %c0_76 = arith.constant 0 : index
    %c0_77 = arith.constant 0 : index
    %145 = vector.load %arg6[%c0_76, %c0_77] : memref<24x128xf32, #tpu.memory_space<vmem>>, vector<24x128xf32>
    %cst_78 = arith.constant dense<0.000000e+00> : vector<8x128xf32>
    %146 = tpu.matmul %144, %145, %cst_78 {dimension_numbers = #tpu.dot_dimension_numbers<[1], [0], [0], [1], [0, 0, 1, 1], [], []>} : vector<8x24xf32>, vector<24x128xf32>, vector<8x128xf32> -> vector<8x128xf32>
    %cst_79 = arith.constant dense<0.000000e+00> : vector<8xf32>
    %147 = vector.multi_reduction <add>, %146, %cst_79 [1] : vector<8x128xf32> to vector<8xf32>
    %148 = vector.shape_cast %147 : vector<8xf32> to vector<8x1xf32>
    %149 = arith.mulf %146, %146 : vector<8x128xf32>
    %cst_80 = arith.constant dense<0.000000e+00> : vector<8xf32>
    %150 = vector.multi_reduction <add>, %149, %cst_80 [1] : vector<8x128xf32> to vector<8xf32>
    %151 = vector.shape_cast %150 : vector<8xf32> to vector<8x1xf32>
    %cst_81 = arith.constant 7.812500e-03 : f32
    %152 = vector.broadcast %cst_81 : f32 to vector<8x1xf32>
    %153 = arith.mulf %148, %152 : vector<8x1xf32>
    %cst_82 = arith.constant 7.812500e-03 : f32
    %154 = vector.broadcast %cst_82 : f32 to vector<8x1xf32>
    %155 = arith.mulf %151, %154 : vector<8x1xf32>
    %156 = arith.mulf %153, %153 : vector<8x1xf32>
    %157 = arith.subf %155, %156 : vector<8x1xf32>
    %cst_83 = arith.constant 0.000000e+00 : f32
    %158 = vector.broadcast %cst_83 : f32 to vector<8x1xf32>
    %159 = arith.maximumf %157, %158 : vector<8x1xf32>
    %c2_84 = arith.constant 2 : index
    %c0_85 = arith.constant 0 : index
    %c0_86 = arith.constant 0 : index
    %160 = vector.load %arg3[%c2_84, %c0_85, %c0_86] : memref<3x8x1xf32, #tpu.memory_space<vmem>>, vector<1x8x1xf32>
    %161 = vector.shape_cast %160 : vector<1x8x1xf32> to vector<8x1xf32>
    %cst_87 = arith.constant 9.99999974E-6 : f32
    %162 = vector.broadcast %cst_87 : f32 to vector<8x1xf32>
    %163 = arith.addf %159, %162 : vector<8x1xf32>
    %164 = math.rsqrt %163 : vector<8x1xf32>
    %165 = arith.mulf %161, %164 : vector<8x1xf32>
    %c2_88 = arith.constant 2 : index
    %c0_89 = arith.constant 0 : index
    %c0_90 = arith.constant 0 : index
    %166 = vector.load %arg4[%c2_88, %c0_89, %c0_90] : memref<3x8x1xf32, #tpu.memory_space<vmem>>, vector<1x8x1xf32>
    %167 = vector.shape_cast %166 : vector<1x8x1xf32> to vector<8x1xf32>
    %168 = arith.mulf %153, %165 : vector<8x1xf32>
    %169 = arith.subf %167, %168 : vector<8x1xf32>
    %170 = vector.broadcast %165 : vector<8x1xf32> to vector<8x128xf32>
    %171 = arith.mulf %146, %170 : vector<8x128xf32>
    %172 = vector.broadcast %169 : vector<8x1xf32> to vector<8x128xf32>
    %173 = arith.addf %171, %172 : vector<8x128xf32>
    %174 = arith.addf %173, %0 : vector<8x128xf32>
    %cst_91 = arith.constant 0.000000e+00 : f32
    %175 = vector.broadcast %cst_91 : f32 to vector<8x128xf32>
    %176 = arith.maximumf %174, %175 : vector<8x128xf32>
    %c0_92 = arith.constant 0 : index
    %c0_93 = arith.constant 0 : index
    %177 = vector.load %arg5[%c0_92, %c0_93] : memref<8x128xf32, #tpu.memory_space<vmem>>, vector<8x128xf32>
    tpu.vector_store %arg5[%c0_92, %c0_93], %176 {strides = array<i32>} : memref<8x128xf32, #tpu.memory_space<vmem>>, vector<8x128xf32>,
    return
  }
  func.func @transform_0(%arg0: i32) -> (i32, i32) {
    %c0_i32 = arith.constant 0 : i32
    %c0_i32_0 = arith.constant 0 : i32
    %c0_i32_1 = arith.constant 0 : i32
    return %c0_i32, %c0_i32_0 : i32, i32
  }
  func.func @transform_1(%arg0: i32) -> (i32, i32, i32) {
    %c0_i32 = arith.constant 0 : i32
    %c0_i32_0 = arith.constant 0 : i32
    %c0_i32_1 = arith.constant 0 : i32
    %c0_i32_2 = arith.constant 0 : i32
    return %c0_i32, %c0_i32_0, %c0_i32_1 : i32, i32, i32
  }
  func.func @transform_2(%arg0: i32) -> (i32, i32, i32) {
    %c0_i32 = arith.constant 0 : i32
    %c0_i32_0 = arith.constant 0 : i32
    %c0_i32_1 = arith.constant 0 : i32
    %c0_i32_2 = arith.constant 0 : i32
    return %c0_i32, %c0_i32_0, %c0_i32_1 : i32, i32, i32
  }
  func.func @transform_3(%arg0: i32) -> (i32, i32, i32) {
    %c0_i32 = arith.constant 0 : i32
    %c0_i32_0 = arith.constant 0 : i32
    %c0_i32_1 = arith.constant 0 : i32
    %c0_i32_2 = arith.constant 0 : i32
    return %c0_i32, %c0_i32_0, %c0_i32_1 : i32, i32, i32
  }
  func.func @transform_4(%arg0: i32) -> (i32, i32) {
    %c0_i32 = arith.constant 0 : i32
    %c0_i32_0 = arith.constant 0 : i32
    %c0_i32_1 = arith.constant 0 : i32
    return %c0_i32, %c0_i32_0 : i32, i32
  }
}

</mosaic_0001>

<llo_original>
// kernel: tpu_custom_call.1
$region0: #{tpu_custom_call.1}
  #allocation0 [shape = 'u32[]', space=smem, size = 0x4, offset = 0x4, fixed_abs, tag = 'smem constant byte address 0x4 - core index']
  #allocation1 [shape = 'u32[144,128]{1,0:T(1,128)}', space=vmem, size = 0x12000, scoped, tag = 'internal scratch']
  #allocation2 [shape = 'f32[24,128]{1,0:T(8,128)}', space=vmem, size = 0x3000, scoped, tag = 'scratch operand']
  %s0 = inlined_call_operand.vmem [shape: f32[8,128], index: 0, kind: input, shape index: {}]
  %s1 = inlined_call_operand.vmem [shape: f32[3,8,24], index: 1, kind: input, shape index: {}]
  %s2 = inlined_call_operand.vmem [shape: f32[3,8,1], index: 2, kind: input, shape index: {}]
  %s3 = inlined_call_operand.vmem [shape: f32[3,8,1], index: 3, kind: input, shape index: {}]
  %s4 = inlined_call_operand.hbm [shape: f32[8,128], index: 4, kind: output, shape index: {}]
  %s5 = sld [smem:[#allocation0]]
  $region26: #{tpu_custom_call.1} parent=0
    _
  %s7 = ssub.s32 1, %s5
  %s8 = scalar_select 0, %s7, %s5
  $region1: #{tpu_custom_call.1} parent=0
    #allocation3 [shape = 'u8[4096]{0}', space=vmem, size = 0x1000, scoped, tag = 'output window, operand 0, single buffered']
    #allocation4 [shape = 's32[1]{0}', space=sflag, size = 0x4, scoped, tag = 'scoped memory for tpu_custom_call.1']
    %9 = vsyncpa [#allocation4], 0
    // Predicated region
    $region2: #{tpu_custom_call.1} parent=1 // pred_check
      _
    $region3: #{tpu_custom_call.1} parent=1 // pred_check_branch
      %11 = sbr.rel (0) target = $region5
    $region4: #{tpu_custom_call.1} parent=1 // pred_region
      _
    $region5: #{tpu_custom_call.1} parent=1 // pred_fallthru
      _
    // Predicated region
    $region6: #{tpu_custom_call.1} parent=1 // pred_check
      _
    $region7: #{tpu_custom_call.1} parent=1 // pred_check_branch
      %13 = sbr.rel (0) target = $region9
    $region8: #{tpu_custom_call.1} parent=1 // pred_region
      _
    $region9: #{tpu_custom_call.1} parent=1 // pred_fallthru
      _
    // Predicated region
    $region10: #{tpu_custom_call.1} parent=1 // pred_check
      _
    $region11: #{tpu_custom_call.1} parent=1 // pred_check_branch
      %15 = sbr.rel (0) target = $region13
    $region12: #{tpu_custom_call.1} parent=1 // pred_region
      _
    $region13: #{tpu_custom_call.1} parent=1 // pred_fallthru
      _
    // Predicated region
    $region14: #{tpu_custom_call.1} parent=1 // pred_check
      _
    $region15: #{tpu_custom_call.1} parent=1 // pred_check_branch
      %17 = sbr.rel (0) target = $region17
    $region16: #{tpu_custom_call.1} parent=1 // pred_region
      _
    $region17: #{tpu_custom_call.1} parent=1 // pred_fallthru
      _
    %v18 = vld [vmem:[%s0] sm:$0xff]
    %v19 = vlaneseq
    %v20 = vand.u32 %v19, 127
    %vm21 = vcmp.lt.s32.totalorder %v20, 0
    %v22 = vsub.s32 0, %v20
    %v23 = vsel %vm21, %v22, %v20
    %v24 = vshrl.u32 %v23, 6
    %v25 = vand.u32 %v23, 63
    %v26 = vsub.s32 0, %v25
    %v27 = vsel %vm21, %v26, %v25
    %vm28 = vcmp.ne.s32.totalorder %v27, 0
    %vm29 = vcmp.lt.s32.totalorder %v27, 0
    %vm30 = vmand %vm29, %vm28
    %v31 = vadd.s32 %v27, 64
    %v32 = vsel %vm30, %v31, %v27
    %vm33 = vcmp.eq.s32.totalorder %v32, 0
    %vm34 = vcmp.eq.s32.totalorder %v32, 63
    %35 = vrot.lane.b32.xlu0 %v18, 1
    %v36 = vpop.permute.xlu0 %35
    %v37 = vsel %vm33, 1, 0
    %vm38 = vcmp.eq.s32.totalorder %v37, 1
    %v39 = vsel %vm38, 0.0, %v36
    %40 = vrot.lane.b32.xlu0 %v18, 127
    %v41 = vpop.permute.xlu0 %40
    %v42 = vsel %vm34, 1, 0
    %vm43 = vcmp.eq.s32.totalorder %v42, 1
    %v44 = vsel %vm43, 0.0, %v41
    %45 = vst [vmem:[#allocation2] sm:$0xff] %v39
    %46 = vst [vmem:[#allocation2 + $0x8] sm:$0xff] %v18
    %47 = vst [vmem:[#allocation2 + $0x10] sm:$0xff] %v44
    %v48 = vld [vmem:[%s1] sm:$0xff]
    %v49 = vld [vmem:[#allocation2] sm:$0xff]
    %v50 = vld [vmem:[#allocation2 + $0x8] sm:$0xff]
    %v51 = vld [vmem:[#allocation2 + $0x10] sm:$0xff]
    %vm52 = vcmask 195584
    %v54 = vsel %vm52, %v48, 0
    %56 = vmatprep.subr.mxu0 0.0
    %57 = vmatpush1.msra.mxu0 %v49
    %58 = vmatprep.subr.mxu0 0.0
    %59 = vmatpush1.msra.mxu0 %v50
    %60 = vmatprep.subr.mxu0 0.0
    %61 = vmatpush1.msra.mxu0 %v51
    %62 = vmatprep.subr.mxu0 0.0
    %63 = vmatpush1.msra.mxu0 0.0
    %64 = vmatprep.subr.mxu0 0.0
    %65 = vmatpush1.msra.mxu0 0.0
    %66 = vmatprep.subr.mxu0 0.0
    %67 = vmatpush1.msra.mxu0 0.0
    %68 = vmatprep.subr.mxu0 0.0
    %69 = vmatpush1.msra.mxu0 0.0
    %70 = vmatprep.subr.mxu0 0.0
    %71 = vmatpush1.msra.mxu0 0.0
    %72 = vmatprep.subr.mxu0 0.0
    %73 = vmatpush1.msra.mxu0 0.0
    %74 = vmatprep.subr.mxu0 0.0
    %75 = vmatpush1.msra.mxu0 0.0
    %76 = vmatprep.subr.mxu0 0.0
    %77 = vmatpush1.msra.mxu0 0.0
    %78 = vmatprep.subr.mxu0 0.0
    %79 = vmatpush1.msra.mxu0 0.0
    %80 = vmatprep.subr.mxu0 0.0
    %81 = vmatpush1.msra.mxu0 0.0
    %82 = vmatprep.subr.mxu0 0.0
    %83 = vmatpush1.msra.mxu0 0.0
    %84 = vmatprep.subr.mxu0 0.0
    %85 = vmatpush1.msra.mxu0 0.0
    %86 = vmatprep.subr.mxu0 0.0
    %87 = vmatpush1.msra.mxu0 0.0
    %88 = vmatprep.subr.mxu0 0.0
    %89 = vmatpush1.msra.mxu0 0.0
    %90 = vmatprep.subr.mxu0 0.0
    %91 = vmatpush1.msra.mxu0 0.0
    %92 = vmatprep.subr.mxu0 0.0
    %93 = vmatpush1.msra.mxu0 0.0
    %94 = vmatprep.subr.mxu0 0.0
    %95 = vmatpush1.msra.mxu0 0.0
    %96 = vmatprep.subr.mxu0 0.0
    %97 = vmatpush1.msra.mxu0 0.0
    %98 = vmatprep.subr.mxu0 0.0
    %99 = vmatpush1.msra.mxu0 0.0
    %100 = vmatprep.subr.mxu0 0.0
    %101 = vmatpush1.msra.mxu0 0.0
    %102 = vmatprep.subr.mxu0 0.0
    %103 = vmatpush1.msra.mxu0 0.0
    %104 = vmatprep.subr.mxu0 0.0
    %105 = vmatpush1.msra.mxu0 0.0
    %106 = vmatprep.subr.mxu0 0.0
    %107 = vmatpush1.msra.mxu0 0.0
    %108 = vmatprep.subr.mxu0 0.0
    %109 = vmatpush1.msra.mxu0 0.0
    %110 = vmatprep.subr.mxu0 0.0
    %111 = vmatpush1.msra.mxu0 0.0
    %112 = vmatprep.subr.mxu0 0.0
    %113 = vmatpush1.msra.mxu0 0.0
    %114 = vmatprep.subr.mxu0 0.0
    %115 = vmatpush1.msra.mxu0 0.0
    %116 = vmatprep.subr.mxu0 0.0
    %117 = vmatpush1.msra.mxu0 0.0
    %118 = vmatprep.subr.mxu0 0.0
    %119 = vmatpush1.msra.mxu0 0.0
    %120 = vmatprep.mubr.f32.mxu0 0.0
    %121 = vmatmul.mubr.f32.gmra.mrb[0].mxu0 %v54
    %v122 = vpop.f32.mrb[0].mxu0
    %v123 = vadd.f32 0.0, %v122
    %v124 = vpop.f32.mrb[0].mxu0
    %125 = vdwg.mxu0
    %126 = vadd.xlane.f32.xlu0 %v123
    %v127 = vpop.xlane.xlu0 %126
    %v128 = vmul.f32 %v123, %v123
    %129 = vadd.xlane.f32.xlu0 %v128
    %v130 = vpop.xlane.xlu0 %129
    %v131 = vmul.f32 %v127, 0.0078125
    %v132 = vmul.f32 %v130, 0.0078125
    %v133 = vmul.f32 %v131, %v131
    %v134 = vsub.f32 %v132, %v133
    %v135 = vmax.f32 %v134, 0.0
    %v136 = vld [vmem:[%s2] sm:$0xff]
    %v137 = vadd.f32 %v135, 1e-05
    %v138 = vrsqrt.pop %v137
    %v139 = vmul.f32 %v136, %v138
    %v140 = vld [vmem:[%s3] sm:$0xff]
    %v141 = vmul.f32 %v131, %v139
    %v142 = vsub.f32 %v140, %v141
    %144 = vset.pattern.permute.xlu0 0
    %145 = vperm.xlu0 %144, %v139
    %v146 = vpop.permute.xlu0 %145
    %v148 = vmul.f32 %v123, %v146
    %150 = vset.pattern.permute.xlu0 0
    %151 = vperm.xlu0 %150, %v142
    %v152 = vpop.permute.xlu0 %151
    %v154 = vadd.f32 %v148, %v152
    %v155 = vmax.f32 %v154, 0.0
    %156 = vrot.lane.b32.xlu0 %v155, 1
    %v157 = vpop.permute.xlu0 %156
    %v158 = vsel %vm38, 0.0, %v157
    %159 = vrot.lane.b32.xlu0 %v155, 127
    %v160 = vpop.permute.xlu0 %159
    %v161 = vsel %vm43, 0.0, %v160
    %162 = vst [vmem:[#allocation2] sm:$0xff] %v158
    %163 = vst [vmem:[#allocation2 + $0x8] sm:$0xff] %v155
    %164 = vst [vmem:[#allocation2 + $0x10] sm:$0xff] %v161
    %s165 = scalar_lea.vmem %s1, 8
    %v166 = vld [vmem:[%s165] sm:$0xff]
    %v167 = vld [vmem:[#allocation2] sm:$0xff]
    %v168 = vld [vmem:[#allocation2 + $0x8] sm:$0xff]
    %v169 = vld [vmem:[#allocation2 + $0x10] sm:$0xff]
    %v171 = vsel %vm52, %v166, 0
    %173 = vmatprep.subr.mxu0 0.0
    %174 = vmatpush1.msra.mxu0 %v167
    %175 = vmatprep.subr.mxu0 0.0
    %176 = vmatpush1.msra.mxu0 %v168
    %177 = vmatprep.subr.mxu0 0.0
    %178 = vmatpush1.msra.mxu0 %v169
    %179 = vmatprep.subr.mxu0 0.0
    %180 = vmatpush1.msra.mxu0 0.0
    %181 = vmatprep.subr.mxu0 0.0
    %182 = vmatpush1.msra.mxu0 0.0
    %183 = vmatprep.subr.mxu0 0.0
    %184 = vmatpush1.msra.mxu0 0.0
    %185 = vmatprep.subr.mxu0 0.0
    %186 = vmatpush1.msra.mxu0 0.0
    %187 = vmatprep.subr.mxu0 0.0
    %188 = vmatpush1.msra.mxu0 0.0
    %189 = vmatprep.subr.mxu0 0.0
    %190 = vmatpush1.msra.mxu0 0.0
    %191 = vmatprep.subr.mxu0 0.0
    %192 = vmatpush1.msra.mxu0 0.0
    %193 = vmatprep.subr.mxu0 0.0
    %194 = vmatpush1.msra.mxu0 0.0
    %195 = vmatprep.subr.mxu0 0.0
    %196 = vmatpush1.msra.mxu0 0.0
    %197 = vmatprep.subr.mxu0 0.0
    %198 = vmatpush1.msra.mxu0 0.0
    %199 = vmatprep.subr.mxu0 0.0
    %200 = vmatpush1.msra.mxu0 0.0
    %201 = vmatprep.subr.mxu0 0.0
    %202 = vmatpush1.msra.mxu0 0.0
    %203 = vmatprep.subr.mxu0 0.0
    %204 = vmatpush1.msra.mxu0 0.0
    %205 = vmatprep.subr.mxu0 0.0
    %206 = vmatpush1.msra.mxu0 0.0
    %207 = vmatprep.subr.mxu0 0.0
    %208 = vmatpush1.msra.mxu0 0.0
    %209 = vmatprep.subr.mxu0 0.0
    %210 = vmatpush1.msra.mxu0 0.0
    %211 = vmatprep.subr.mxu0 0.0
    %212 = vmatpush1.msra.mxu0 0.0
    %213 = vmatprep.subr.mxu0 0.0
    %214 = vmatpush1.msra.mxu0 0.0
    %215 = vmatprep.subr.mxu0 0.0
    %216 = vmatpush1.msra.mxu0 0.0
    %217 = vmatprep.subr.mxu0 0.0
    %218 = vmatpush1.msra.mxu0 0.0
    %219 = vmatprep.subr.mxu0 0.0
    %220 = vmatpush1.msra.mxu0 0.0
    %221 = vmatprep.subr.mxu0 0.0
    %222 = vmatpush1.msra.mxu0 0.0
    %223 = vmatprep.subr.mxu0 0.0
    %224 = vmatpush1.msra.mxu0 0.0
    %225 = vmatprep.subr.mxu0 0.0
    %226 = vmatpush1.msra.mxu0 0.0
    %227 = vmatprep.subr.mxu0 0.0
    %228 = vmatpush1.msra.mxu0 0.0
    %229 = vmatprep.subr.mxu0 0.0
    %230 = vmatpush1.msra.mxu0 0.0
    %231 = vmatprep.subr.mxu0 0.0
    %232 = vmatpush1.msra.mxu0 0.0
    %233 = vmatprep.subr.mxu0 0.0
    %234 = vmatpush1.msra.mxu0 0.0
    %235 = vmatprep.subr.mxu0 0.0
    %236 = vmatpush1.msra.mxu0 0.0
    %237 = vmatprep.mubr.f32.mxu0 0.0
    %238 = vmatmul.mubr.f32.gmra.mrb[0].mxu0 %v171
    %v239 = vpop.f32.mrb[0].mxu0
    %v240 = vadd.f32 0.0, %v239
    %v241 = vpop.f32.mrb[0].mxu0
    %242 = vdwg.mxu0
    %243 = vadd.xlane.f32.xlu0 %v240
    %v244 = vpop.xlane.xlu0 %243
    %v245 = vmul.f32 %v240, %v240
    %246 = vadd.xlane.f32.xlu0 %v245
    %v247 = vpop.xlane.xlu0 %246
    %v248 = vmul.f32 %v244, 0.0078125
    %v249 = vmul.f32 %v247, 0.0078125
    %v250 = vmul.f32 %v248, %v248
    %v251 = vsub.f32 %v249, %v250
    %v252 = vmax.f32 %v251, 0.0
    %s253 = scalar_lea.vmem %s2, 8
    %v254 = vld [vmem:[%s253] sm:$0xff]
    %v255 = vadd.f32 %v252, 1e-05
    %v256 = vrsqrt.pop %v255
    %v257 = vmul.f32 %v254, %v256
    %s258 = scalar_lea.vmem %s3, 8
    %v259 = vld [vmem:[%s258] sm:$0xff]
    %v260 = vmul.f32 %v248, %v257
    %v261 = vsub.f32 %v259, %v260
    %263 = vset.pattern.permute.xlu0 0
    %264 = vperm.xlu0 %263, %v257
    %v265 = vpop.permute.xlu0 %264
    %v267 = vmul.f32 %v240, %v265
    %269 = vset.pattern.permute.xlu0 0
    %270 = vperm.xlu0 %269, %v261
    %v271 = vpop.permute.xlu0 %270
    %v273 = vadd.f32 %v267, %v271
    %v274 = vmax.f32 %v273, 0.0
    %275 = vrot.lane.b32.xlu0 %v274, 1
    %v276 = vpop.permute.xlu0 %275
    %v277 = vsel %vm38, 0.0, %v276
    %278 = vrot.lane.b32.xlu0 %v274, 127
    %v279 = vpop.permute.xlu0 %278
    %v280 = vsel %vm43, 0.0, %v279
    %281 = vst [vmem:[#allocation2] sm:$0xff] %v277
    %282 = vst [vmem:[#allocation2 + $0x8] sm:$0xff] %v274
    %283 = vst [vmem:[#allocation2 + $0x10] sm:$0xff] %v280
    %s284 = scalar_lea.vmem %s1, 16
    %v285 = vld [vmem:[%s284] sm:$0xff]
    %v286 = vld [vmem:[#allocation2] sm:$0xff]
    %v287 = vld [vmem:[#allocation2 + $0x8] sm:$0xff]
    %v288 = vld [vmem:[#allocation2 + $0x10] sm:$0xff]
    %v290 = vsel %vm52, %v285, 0
    %292 = vmatprep.subr.mxu0 0.0
    %293 = vmatpush1.msra.mxu0 %v286
    %294 = vmatprep.subr.mxu0 0.0
    %295 = vmatpush1.msra.mxu0 %v287
    %296 = vmatprep.subr.mxu0 0.0
    %297 = vmatpush1.msra.mxu0 %v288
    %298 = vmatprep.subr.mxu0 0.0
    %299 = vmatpush1.msra.mxu0 0.0
    %300 = vmatprep.subr.mxu0 0.0
    %301 = vmatpush1.msra.mxu0 0.0
    %302 = vmatprep.subr.mxu0 0.0
    %303 = vmatpush1.msra.mxu0 0.0
    %304 = vmatprep.subr.mxu0 0.0
    %305 = vmatpush1.msra.mxu0 0.0
    %306 = vmatprep.subr.mxu0 0.0
    %307 = vmatpush1.msra.mxu0 0.0
    %308 = vmatprep.subr.mxu0 0.0
    %309 = vmatpush1.msra.mxu0 0.0
    %310 = vmatprep.subr.mxu0 0.0
    %311 = vmatpush1.msra.mxu0 0.0
    %312 = vmatprep.subr.mxu0 0.0
    %313 = vmatpush1.msra.mxu0 0.0
    %314 = vmatprep.subr.mxu0 0.0
    %315 = vmatpush1.msra.mxu0 0.0
    %316 = vmatprep.subr.mxu0 0.0
    %317 = vmatpush1.msra.mxu0 0.0
    %318 = vmatprep.subr.mxu0 0.0
    %319 = vmatpush1.msra.mxu0 0.0
    %320 = vmatprep.subr.mxu0 0.0
    %321 = vmatpush1.msra.mxu0 0.0
    %322 = vmatprep.subr.mxu0 0.0
    %323 = vmatpush1.msra.mxu0 0.0
    %324 = vmatprep.subr.mxu0 0.0
    %325 = vmatpush1.msra.mxu0 0.0
    %326 = vmatprep.subr.mxu0 0.0
    %327 = vmatpush1.msra.mxu0 0.0
    %328 = vmatprep.subr.mxu0 0.0
    %329 = vmatpush1.msra.mxu0 0.0
    %330 = vmatprep.subr.mxu0 0.0
    %331 = vmatpush1.msra.mxu0 0.0
    %332 = vmatprep.subr.mxu0 0.0
    %333 = vmatpush1.msra.mxu0 0.0
    %334 = vmatprep.subr.mxu0 0.0
    %335 = vmatpush1.msra.mxu0 0.0
    %336 = vmatprep.subr.mxu0 0.0
    %337 = vmatpush1.msra.mxu0 0.0
    %338 = vmatprep.subr.mxu0 0.0
    %339 = vmatpush1.msra.mxu0 0.0
    %340 = vmatprep.subr.mxu0 0.0
    %341 = vmatpush1.msra.mxu0 0.0
    %342 = vmatprep.subr.mxu0 0.0
    %343 = vmatpush1.msra.mxu0 0.0
    %344 = vmatprep.subr.mxu0 0.0
    %345 = vmatpush1.msra.mxu0 0.0
    %346 = vmatprep.subr.mxu0 0.0
    %347 = vmatpush1.msra.mxu0 0.0
    %348 = vmatprep.subr.mxu0 0.0
    %349 = vmatpush1.msra.mxu0 0.0
    %350 = vmatprep.subr.mxu0 0.0
    %351 = vmatpush1.msra.mxu0 0.0
    %352 = vmatprep.subr.mxu0 0.0
    %353 = vmatpush1.msra.mxu0 0.0
    %354 = vmatprep.subr.mxu0 0.0
    %355 = vmatpush1.msra.mxu0 0.0
    %356 = vmatprep.mubr.f32.mxu0 0.0
    %357 = vmatmul.mubr.f32.gmra.mrb[0].mxu0 %v290
    %v358 = vpop.f32.mrb[0].mxu0
    %v359 = vadd.f32 0.0, %v358
    %v360 = vpop.f32.mrb[0].mxu0
    %361 = vdwg.mxu0
    %362 = vadd.xlane.f32.xlu0 %v359
    %v363 = vpop.xlane.xlu0 %362
    %v364 = vmul.f32 %v359, %v359
    %365 = vadd.xlane.f32.xlu0 %v364
    %v366 = vpop.xlane.xlu0 %365
    %v367 = vmul.f32 %v363, 0.0078125
    %v368 = vmul.f32 %v366, 0.0078125
    %v369 = vmul.f32 %v367, %v367
    %v370 = vsub.f32 %v368, %v369
    %v371 = vmax.f32 %v370, 0.0
    %s372 = scalar_lea.vmem %s2, 16
    %v373 = vld [vmem:[%s372] sm:$0xff]
    %v374 = vadd.f32 %v371, 1e-05
    %v375 = vrsqrt.pop %v374
    %v376 = vmul.f32 %v373, %v375
    %s377 = scalar_lea.vmem %s3, 16
    %v378 = vld [vmem:[%s377] sm:$0xff]
    %v379 = vmul.f32 %v367, %v376
    %v380 = vsub.f32 %v378, %v379
    %382 = vset.pattern.permute.xlu0 0
    %383 = vperm.xlu0 %382, %v376
    %v384 = vpop.permute.xlu0 %383
    %v386 = vmul.f32 %v359, %v384
    %388 = vset.pattern.permute.xlu0 0
    %389 = vperm.xlu0 %388, %v380
    %v390 = vpop.permute.xlu0 %389
    %v392 = vadd.f32 %v386, %v390
    %v393 = vadd.f32 %v392, %v18
    %v394 = vmax.f32 %v393, 0.0
    %395 = vst [vmem:[#allocation3] sm:$0xff] %v394
    // Predicated region
    $region18: #{tpu_custom_call.1} parent=1 // pred_check
      _
    $region19: #{tpu_custom_call.1} parent=1 // pred_check_branch
      %397 = sbr.rel (0) target = $region21
    $region20: #{tpu_custom_call.1} parent=1 // pred_region
      %s399 = ssub.s32 128, 128
      %400 = vsyncadd [#allocation4], %s399
      %s402 = sshll.u32 [#allocation3], 4
      %s403 = int_to_ptr.vmem [resolvable:$true] %s402
      %405 = dma.vmem_to_hbm [thread:$0]  %s403, 128, %s4, [#allocation4]
    $region21: #{tpu_custom_call.1} parent=1 // pred_fallthru
      _
    // Predicated region
    $region22: #{tpu_custom_call.1} parent=1 // pred_check
      _
    $region23: #{tpu_custom_call.1} parent=1 // pred_check_branch
      %407 = sbr.rel (0) target = $region25
    $region24: #{tpu_custom_call.1} parent=1 // pred_region
      %408 = dma.done [#allocation4], 128
    $region25: #{tpu_custom_call.1} parent=1 // pred_fallthru
      _
    %409 = vsyncpa [#allocation4], 1

</llo_original>
